<compile_context>
chip_gen: v6e
topology: v6e:2x2x1
jax: 0.10.0
libtpu: 0.0.40
codegen_flags: <defaults>
</compile_context>

<pallas_src>
import jax
import jax.numpy as jnp
from jax.experimental import pallas as pl
from jax.experimental.pallas import tpu as pltpu

# ----- constants standing in for the missing `C` config module -------------
STATE_DIM = 33                     # Udacity Reacher (p2_continuous-control)
ACTION_DIM = 4
CRITIC_NET_STRUCTURE = [64, 32]
NET_STRUCTURE = CRITIC_NET_STRUCTURE + [1]     # [h0, h1, 1]
H0, H1 = NET_STRUCTURE[0], NET_STRUCTURE[1]

_SPLIT_MIN_B = 256   # force >=2 grid steps above this batch (v7x megacore)


def _cdiv(a, b):
    return -(-a // b)


def _round_up(x, m):
    return _cdiv(x, m) * m


# --------------------------------------------------------------------------
# Kernel: one batch tile -> out = relu(state @ Wf_s + action @ Wf_a + bf)
# --------------------------------------------------------------------------
def critic_fused_kernel(s_ref, a_ref, ws_ref, wa_ref, b_ref, out_ref):
    acc = jnp.dot(s_ref[...], ws_ref[...], preferred_element_type=jnp.float32)
    acc = acc + jnp.dot(a_ref[...], wa_ref[...],
                        preferred_element_type=jnp.float32)
    out_ref[...] = jnp.maximum(acc + b_ref[...], 0.0)
    # TODO(synk): if the upstream `net[:-1]` slice is ever fixed to keep the
    # final Linear(h1 -> 1), add that matmul + bias here (after the ReLU the
    # single-affine fusion no longer applies past this point).


# --------------------------------------------------------------------------
# Parameter fusion (hoisted: call once per weight update, not per forward)
# --------------------------------------------------------------------------
def fuse_params(params, dtype=jnp.float32):
    """Fold (W_s,b_s,W_a,b_a,W_1,b_1) into one affine map, split per input.

        relu(cat(s@Ws+bs, a@Wa+ba) @ W1 + b1)
      = relu(s @ (Ws@W1_top) + a @ (Wa@W1_bot) + (bs@W1_top + ba@W1_bot + b1))

    `dtype` controls the MXU operand dtype of the fused weights (bf16 halves
    their DMA bytes; accumulation stays f32 in the kernel).
    """
    w1_top = params["w1_t"][:H0]                                   # (h0, h1)
    w1_bot = params["w1_t"][H0:]                                   # (h0, h1)
    wf_s = (params["ws_t"] @ w1_top).astype(dtype)                 # (33, h1)
    wf_a = (params["wa_t"] @ w1_bot).astype(dtype)                 # (4,  h1)
    bf = (params["bs"] @ w1_top + params["ba"] @ w1_bot
          + params["b1"]).astype(jnp.float32)                      # (1,  h1)
    return {"wf_s": wf_s, "wf_a": wf_a, "bf": bf}


# --------------------------------------------------------------------------
# Forward
# --------------------------------------------------------------------------
def critic_forward(state, action, fused, *, tb=512):
    """Batch-tiled fused Critic forward.

    state:  (B, STATE_DIM)  f32 or bf16
    action: (B, ACTION_DIM) f32 or bf16
    fused:  output of fuse_params()
    """
    B = state.shape[0]

    # Balanced, sublane-aligned batch tiles; >=2 grid steps for large batches
    # so v7x's second TensorCore gets work via the "parallel" axis.
    n_tiles = _cdiv(B, tb)
    if n_tiles == 1 and B >= _SPLIT_MIN_B:
        n_tiles = 2
    tb_eff = _round_up(_cdiv(B, n_tiles), 8)
    grid = (_cdiv(B, tb_eff),)   # ragged tail handled by masked boundary tile

    return pl.pallas_call(
        critic_fused_kernel,
        out_shape=jax.ShapeDtypeStruct((B, H1), jnp.float32),
        grid=grid,
        in_specs=[
            pl.BlockSpec((tb_eff, STATE_DIM), lambda i: (i, 0)),   # batch-tiled
            pl.BlockSpec((tb_eff, ACTION_DIM), lambda i: (i, 0)),  # batch-tiled
            pl.BlockSpec((STATE_DIM, H1), lambda i: (0, 0)),       # resident
            pl.BlockSpec((ACTION_DIM, H1), lambda i: (0, 0)),      # resident
            pl.BlockSpec((1, H1), lambda i: (0, 0)),               # resident
        ],
        out_specs=pl.BlockSpec((tb_eff, H1), lambda i: (i, 0)),
        compiler_params=pltpu.CompilerParams(
            dimension_semantics=("parallel",)),   # megacore sharding on v7x
    )(state, action, fused["wf_s"], fused["wf_a"], fused["bf"])


# --------------------------------------------------------------------------
# Synthetic params + un-fused reference (matches the PyTorch module)
# --------------------------------------------------------------------------
def init_params(key):
    ks = jax.random.split(key, 6)

    def kaiming_t(k, fan_in, fan_out):
        # kaiming_normal_ on a (fan_out, fan_in) weight; stored transposed.
        return (jax.random.normal(k, (fan_in, fan_out), jnp.float32)
                * jnp.sqrt(2.0 / fan_in))

    def bias(k, fan_in, n):
        bound = 1.0 / jnp.sqrt(jnp.float32(fan_in))
        return jax.random.uniform(k, (1, n), jnp.float32, -bound, bound)

    return {
        "ws_t": kaiming_t(ks[0], STATE_DIM, H0),
        "bs":   bias(ks[1], STATE_DIM, H0),
        "wa_t": kaiming_t(ks[2], ACTION_DIM, H0),
        "ba":   bias(ks[3], ACTION_DIM, H0),
        "w1_t": kaiming_t(ks[4], 2 * H0, H1),
        "b1":   bias(ks[5], 2 * H0, H1),
    }


def critic_reference(state, action, params):
    h_s = state @ params["ws_t"] + params["bs"]
    h_a = action @ params["wa_t"] + params["ba"]
    cat = jnp.concatenate([h_s, h_a], axis=-1)
    return jnp.maximum(cat @ params["w1_t"] + params["b1"], 0.0)


if __name__ == "__main__":
    key = jax.random.PRNGKey(0)
    k_state, k_action, k_params = jax.random.split(key, 3)
    params = init_params(k_params)
    fused_f32 = fuse_params(params)          # hoisted: once per weight update

    # --- small single-tile case (f32) --------------------------------------
    batch = 8
    state = jax.random.normal(k_state, (batch, STATE_DIM), jnp.float32)
    action = jax.random.normal(k_action, (batch, ACTION_DIM), jnp.float32)
    out = jax.block_until_ready(critic_forward(state, action, fused_f32))
    ref = critic_reference(state, action, params)
    assert out.shape == (batch, H1), out.shape
    assert jnp.allclose(out, ref, atol=1e-4, rtol=1e-4), "mismatch vs reference"

    # --- ragged multi-tile grid (B=20, tb=8 -> 3 tiles, masked tail) -------
    batch2 = 20
    state2 = jax.random.normal(jax.random.PRNGKey(1), (batch2, STATE_DIM),
                               jnp.float32)
    action2 = jax.random.normal(jax.random.PRNGKey(2), (batch2, ACTION_DIM),
                                jnp.float32)
    out2 = jax.block_until_ready(critic_forward(state2, action2, fused_f32,
                                                tb=8))
    ref2 = critic_reference(state2, action2, params)
    assert out2.shape == (batch2, H1), out2.shape
    assert jnp.allclose(out2, ref2, atol=1e-4, rtol=1e-4), \
        "mismatch vs reference (ragged tiles)"

    # --- large batch, bf16 MXU operands, forced >=2 grid steps (v7x path) --
    batch3 = 300
    state3 = jax.random.normal(jax.random.PRNGKey(3), (batch3, STATE_DIM),
                               jnp.float32)
    action3 = jax.random.normal(jax.random.PRNGKey(4), (batch3, ACTION_DIM),
                                jnp.float32)
    fused_bf16 = fuse_params(params, dtype=jnp.bfloat16)
    out3 = jax.block_until_ready(
        critic_forward(state3.astype(jnp.bfloat16),
                       action3.astype(jnp.bfloat16), fused_bf16))
    ref3 = critic_reference(state3, action3, params)
    assert out3.shape == (batch3, H1), out3.shape
    # bf16 MXU operands (f32 accumulate) -> loosened tolerance vs the f32 ref.
    assert jnp.allclose(out3, ref3, atol=1e-1, rtol=1e-1), \
        "mismatch vs reference (bf16 operands)"

    print("KERNEL_OK")
</pallas_src>

<mosaic_0001>
module attributes {stable_mosaic.version = 11 : i64} {
  func.func @critic_fused_kernel(%arg0: i32, %arg1: memref<8x33xf32, #tpu.memory_space<vmem>>, %arg2: memref<8x4xf32, #tpu.memory_space<vmem>>, %arg3: memref<33x32xf32, #tpu.memory_space<vmem>>, %arg4: memref<4x32xf32, #tpu.memory_space<vmem>>, %arg5: memref<1x32xf32, #tpu.memory_space<vmem>>, %arg6: memref<8x32xf32, #tpu.memory_space<vmem>>) attributes {dimension_semantics = [#tpu.dimension_semantics<parallel>], iteration_bounds = array<i64: 1>, scalar_prefetch = 0 : i64, scratch_operands = 0 : i64, tpu.core_type = #tpu.core_type<tc>, window_params = [{transform_indices = @transform_0, window_bounds = array<i64: 8, 33>}, {transform_indices = @transform_1, window_bounds = array<i64: 8, 4>}, {pipeline_mode = #tpu.pipeline_mode<synchronous>, transform_indices = @transform_2, window_bounds = array<i64: 33, 32>}, {pipeline_mode = #tpu.pipeline_mode<synchronous>, transform_indices = @transform_3, window_bounds = array<i64: 4, 32>}, {pipeline_mode = #tpu.pipeline_mode<synchronous>, transform_indices = @transform_4, window_bounds = array<i64: 1, 32>}, {transform_indices = @transform_5, window_bounds = array<i64: 8, 32>}]} {
    %c0 = arith.constant 0 : index
    %c0_0 = arith.constant 0 : index
    %0 = vector.load %arg1[%c0, %c0_0] : memref<8x33xf32, #tpu.memory_space<vmem>>, vector<8x33xf32>
    %c0_1 = arith.constant 0 : index
    %c0_2 = arith.constant 0 : index
    %1 = vector.load %arg3[%c0_1, %c0_2] : memref<33x32xf32, #tpu.memory_space<vmem>>, vector<33x32xf32>
    %cst = arith.constant dense<0.000000e+00> : vector<8x32xf32>
    %2 = tpu.matmul %0, %1, %cst {dimension_numbers = #tpu.dot_dimension_numbers<[1], [0], [0], [1], [0, 0, 1, 1], [], []>} : vector<8x33xf32>, vector<33x32xf32>, vector<8x32xf32> -> vector<8x32xf32>
    %c0_3 = arith.constant 0 : index
    %c0_4 = arith.constant 0 : index
    %3 = vector.load %arg2[%c0_3, %c0_4] : memref<8x4xf32, #tpu.memory_space<vmem>>, vector<8x4xf32>
    %c0_5 = arith.constant 0 : index
    %c0_6 = arith.constant 0 : index
    %4 = vector.load %arg4[%c0_5, %c0_6] : memref<4x32xf32, #tpu.memory_space<vmem>>, vector<4x32xf32>
    %cst_7 = arith.constant dense<0.000000e+00> : vector<8x32xf32>
    %5 = tpu.matmul %3, %4, %cst_7 {dimension_numbers = #tpu.dot_dimension_numbers<[1], [0], [0], [1], [0, 0, 1, 1], [], []>} : vector<8x4xf32>, vector<4x32xf32>, vector<8x32xf32> -> vector<8x32xf32>
    %6 = arith.addf %2, %5 : vector<8x32xf32>
    %c0_8 = arith.constant 0 : index
    %c0_9 = arith.constant 0 : index
    %7 = vector.load %arg5[%c0_8, %c0_9] : memref<1x32xf32, #tpu.memory_space<vmem>>, vector<1x32xf32>
    %8 = vector.broadcast %7 : vector<1x32xf32> to vector<8x32xf32>
    %9 = arith.addf %6, %8 : vector<8x32xf32>
    %cst_10 = arith.constant 0.000000e+00 : f32
    %10 = vector.broadcast %cst_10 : f32 to vector<8x32xf32>
    %11 = arith.maximumf %9, %10 : vector<8x32xf32>
    %c0_11 = arith.constant 0 : index
    %c0_12 = arith.constant 0 : index
    %12 = vector.load %arg6[%c0_11, %c0_12] : memref<8x32xf32, #tpu.memory_space<vmem>>, vector<8x32xf32>
    tpu.vector_store %arg6[%c0_11, %c0_12], %11 {strides = array<i32>} : memref<8x32xf32, #tpu.memory_space<vmem>>, vector<8x32xf32>,
    return
  }
  func.func @transform_0(%arg0: i32) -> (i32, i32) {
    %c0_i32 = arith.constant 0 : i32
    %c0_i32_0 = arith.constant 0 : i32
    return %arg0, %c0_i32 : i32, i32
  }
  func.func @transform_1(%arg0: i32) -> (i32, i32) {
    %c0_i32 = arith.constant 0 : i32
    %c0_i32_0 = arith.constant 0 : i32
    return %arg0, %c0_i32 : i32, i32
  }
  func.func @transform_2(%arg0: i32) -> (i32, i32) {
    %c0_i32 = arith.constant 0 : i32
    %c0_i32_0 = arith.constant 0 : i32
    %c0_i32_1 = arith.constant 0 : i32
    return %c0_i32, %c0_i32_0 : i32, i32
  }
  func.func @transform_3(%arg0: i32) -> (i32, i32) {
    %c0_i32 = arith.constant 0 : i32
    %c0_i32_0 = arith.constant 0 : i32
    %c0_i32_1 = arith.constant 0 : i32
    return %c0_i32, %c0_i32_0 : i32, i32
  }
  func.func @transform_4(%arg0: i32) -> (i32, i32) {
    %c0_i32 = arith.constant 0 : i32
    %c0_i32_0 = arith.constant 0 : i32
    %c0_i32_1 = arith.constant 0 : i32
    return %c0_i32, %c0_i32_0 : i32, i32
  }
  func.func @transform_5(%arg0: i32) -> (i32, i32) {
    %c0_i32 = arith.constant 0 : i32
    %c0_i32_0 = arith.constant 0 : i32
    return %arg0, %c0_i32 : i32, i32
  }
}

</mosaic_0001>

<llo_original>
// kernel: tpu_custom_call.1
$region0: #{tpu_custom_call.1}
  #allocation0 [shape = 'u32[]', space=smem, size = 0x4, offset = 0x4, fixed_abs, tag = 'smem constant byte address 0x4 - core index']
  #allocation1 [shape = 'u32[144,128]{1,0:T(1,128)}', space=vmem, size = 0x12000, scoped, tag = 'internal scratch']
  %s0 = inlined_call_operand.vmem [shape: f32[8,33], index: 0, kind: input, shape index: {}]
  %s1 = inlined_call_operand.vmem [shape: f32[8,4], index: 1, kind: input, shape index: {}]
  %s2 = inlined_call_operand.vmem [shape: f32[33,32], index: 2, kind: input, shape index: {}]
  %s3 = inlined_call_operand.vmem [shape: f32[4,32], index: 3, kind: input, shape index: {}]
  %s4 = inlined_call_operand.vmem [shape: f32[1,32], index: 4, kind: input, shape index: {}]
  %s5 = inlined_call_operand.hbm [shape: f32[8,32], index: 5, kind: output, shape index: {}]
  %s6 = sld [smem:[#allocation0]]
  $region30: #{tpu_custom_call.1} parent=0
    _
  %s8 = ssub.s32 1, %s6
  %s9 = scalar_select 0, %s8, %s6
  $region1: #{tpu_custom_call.1} parent=0
    #allocation2 [shape = 'u8[4096]{0}', space=vmem, size = 0x1000, scoped, tag = 'output window, operand 0, single buffered']
    #allocation3 [shape = 's32[1]{0}', space=sflag, size = 0x4, scoped, tag = 'scoped memory for tpu_custom_call.1']
    %10 = vsyncpa [#allocation3], 0
    // Predicated region
    $region2: #{tpu_custom_call.1} parent=1 // pred_check
      _
    $region3: #{tpu_custom_call.1} parent=1 // pred_check_branch
      %12 = sbr.rel (0) target = $region5
    $region4: #{tpu_custom_call.1} parent=1 // pred_region
      _
    $region5: #{tpu_custom_call.1} parent=1 // pred_fallthru
      _
    // Predicated region
    $region6: #{tpu_custom_call.1} parent=1 // pred_check
      _
    $region7: #{tpu_custom_call.1} parent=1 // pred_check_branch
      %14 = sbr.rel (0) target = $region9
    $region8: #{tpu_custom_call.1} parent=1 // pred_region
      _
    $region9: #{tpu_custom_call.1} parent=1 // pred_fallthru
      _
    // Predicated region
    $region10: #{tpu_custom_call.1} parent=1 // pred_check
      _
    $region11: #{tpu_custom_call.1} parent=1 // pred_check_branch
      %16 = sbr.rel (0) target = $region13
    $region12: #{tpu_custom_call.1} parent=1 // pred_region
      _
    $region13: #{tpu_custom_call.1} parent=1 // pred_fallthru
      _
    // Predicated region
    $region14: #{tpu_custom_call.1} parent=1 // pred_check
      _
    $region15: #{tpu_custom_call.1} parent=1 // pred_check_branch
      %18 = sbr.rel (0) target = $region17
    $region16: #{tpu_custom_call.1} parent=1 // pred_region
      _
    $region17: #{tpu_custom_call.1} parent=1 // pred_fallthru
      _
    // Predicated region
    $region18: #{tpu_custom_call.1} parent=1 // pred_check
      _
    $region19: #{tpu_custom_call.1} parent=1 // pred_check_branch
      %20 = sbr.rel (0) target = $region21
    $region20: #{tpu_custom_call.1} parent=1 // pred_region
      _
    $region21: #{tpu_custom_call.1} parent=1 // pred_fallthru
      _
    %v21 = vld [vmem:[%s0] sm:$0xff]
    %v22 = vld [vmem:[%s2] sm:$0xff]
    %v23 = vld [vmem:[%s2 + $0x8] sm:$0xff]
    %v24 = vld [vmem:[%s2 + $0x10] sm:$0xff]
    %v25 = vld [vmem:[%s2 + $0x18] sm:$0xff]
    %v26 = vld [vmem:[%s2 + $0x20] sm:$0x1]
    %v27 = vld [vmem:[%s1] sm:$0xff]
    %v28 = vld [vmem:[%s3] sm:$0xf]
    %vm29 = vcmask 31744
    %v31 = vsel %vm29, %v27, 0
    %vm33 = vcmask 1043456
    %v35 = vsel %vm33, %v28, 0
    %37 = vmatprep.subr.mxu0 0.0
    %38 = vmatpush1.msra.mxu0 0.0
    %39 = vmatprep.subr.mxu0 0.0
    %40 = vmatpush1.msra.mxu0 0.0
    %41 = vmatprep.subr.mxu0 0.0
    %42 = vmatpush1.msra.mxu0 0.0
    %43 = vmatprep.subr.mxu0 0.0
    %44 = vmatpush1.msra.mxu0 0.0
    %45 = vmatprep.subr.mxu0 0.0
    %46 = vmatpush1.msra.mxu0 0.0
    %47 = vmatprep.subr.mxu0 0.0
    %48 = vmatpush1.msra.mxu0 0.0
    %49 = vmatprep.subr.mxu0 0.0
    %50 = vmatpush1.msra.mxu0 0.0
    %51 = vmatprep.subr.mxu0 0.0
    %52 = vmatpush1.msra.mxu0 0.0
    %53 = vmatprep.subr.mxu0 0.0
    %54 = vmatpush1.msra.mxu0 0.0
    %55 = vmatprep.subr.mxu0 0.0
    %56 = vmatpush1.msra.mxu0 0.0
    %57 = vmatprep.subr.mxu0 0.0
    %58 = vmatpush1.msra.mxu0 0.0
    %59 = vmatprep.subr.mxu0 0.0
    %60 = vmatpush1.msra.mxu0 0.0
    %61 = vmatprep.subr.mxu0 0.0
    %62 = vmatpush1.msra.mxu0 0.0
    %63 = vmatprep.subr.mxu0 0.0
    %64 = vmatpush1.msra.mxu0 0.0
    %65 = vmatprep.subr.mxu0 0.0
    %66 = vmatpush1.msra.mxu0 0.0
    %67 = vmatprep.subr.mxu0 0.0
    %68 = vmatpush1.msra.mxu0 %v35
    %69 = vmatprep.subr.mxu0 0.0
    %70 = vmatpush2.msra.mxu0 0.0
    %71 = vmatprep.subr.mxu0 0.0
    %72 = vmatpush2.msra.mxu0 0.0
    %73 = vmatprep.subr.mxu0 0.0
    %74 = vmatpush2.msra.mxu0 0.0
    %75 = vmatprep.subr.mxu0 0.0
    %76 = vmatpush2.msra.mxu0 0.0
    %77 = vmatprep.subr.mxu0 0.0
    %78 = vmatpush2.msra.mxu0 0.0
    %79 = vmatprep.subr.mxu0 0.0
    %80 = vmatpush2.msra.mxu0 0.0
    %81 = vmatprep.subr.mxu0 0.0
    %82 = vmatpush2.msra.mxu0 0.0
    %83 = vmatprep.subr.mxu0 0.0
    %84 = vmatpush2.msra.mxu0 0.0
    %85 = vmatprep.subr.mxu0 0.0
    %86 = vmatpush2.msra.mxu0 0.0
    %87 = vmatprep.subr.mxu0 0.0
    %88 = vmatpush2.msra.mxu0 0.0
    %89 = vmatprep.subr.mxu0 0.0
    %90 = vmatpush2.msra.mxu0 0.0
    %91 = vmatprep.subr.mxu0 0.0
    %92 = vmatpush2.msra.mxu0 0.0
    %93 = vmatprep.subr.mxu0 0.0
    %94 = vmatpush2.msra.mxu0 0.0
    %95 = vmatprep.subr.mxu0 0.0
    %96 = vmatpush2.msra.mxu0 0.0
    %97 = vmatprep.subr.mxu0 0.0
    %98 = vmatpush2.msra.mxu0 0.0
    %99 = vmatprep.subr.mxu0 0.0
    %100 = vmatpush2.msra.mxu0 0.0
    %101 = vmatprep.mubr.f32.mxu0 0.0
    %102 = vmatmul.mubr.f32.gmra.mxu0 %v31
    %v103 = vpop.f32.mrf.mxu0
    %v104 = vadd.f32 0.0, %v103
    %v105 = vpop.f32.mrf.mxu0
    %106 = vdwg.mxu0
    %vm107 = vcmask 269312
    %v109 = vsel %vm107, %v21, 0
    %vm111 = vcmask 1040384
    %v113 = vsel %vm111, %v26, 0
    %115 = vmatprep.subr.mxu0 0.0
    %116 = vmatpush1.msra.mxu0 0.0
    %117 = vmatprep.subr.mxu0 0.0
    %118 = vmatpush1.msra.mxu0 0.0
    %119 = vmatprep.subr.mxu0 0.0
    %120 = vmatpush1.msra.mxu0 0.0
    %121 = vmatprep.subr.mxu0 0.0
    %122 = vmatpush1.msra.mxu0 0.0
    %123 = vmatprep.subr.mxu0 0.0
    %124 = vmatpush1.msra.mxu0 0.0
    %125 = vmatprep.subr.mxu0 0.0
    %126 = vmatpush1.msra.mxu0 0.0
    %127 = vmatprep.subr.mxu0 0.0
    %128 = vmatpush1.msra.mxu0 0.0
    %129 = vmatprep.subr.mxu0 0.0
    %130 = vmatpush1.msra.mxu0 0.0
    %131 = vmatprep.subr.mxu0 0.0
    %132 = vmatpush1.msra.mxu0 0.0
    %133 = vmatprep.subr.mxu0 0.0
    %134 = vmatpush1.msra.mxu0 0.0
    %135 = vmatprep.subr.mxu0 0.0
    %136 = vmatpush1.msra.mxu0 0.0
    %137 = vmatprep.subr.mxu0 0.0
    %138 = vmatpush1.msra.mxu0 %v113
    %139 = vmatprep.subr.mxu0 0.0
    %140 = vmatpush1.msra.mxu0 %v25
    %141 = vmatprep.subr.mxu0 0.0
    %142 = vmatpush1.msra.mxu0 %v24
    %143 = vmatprep.subr.mxu0 0.0
    %144 = vmatpush1.msra.mxu0 %v23
    %145 = vmatprep.subr.mxu0 0.0
    %146 = vmatpush1.msra.mxu0 %v22
    %147 = vmatprep.subr.mxu0 0.0
    %148 = vmatpush2.msra.mxu0 0.0
    %149 = vmatprep.subr.mxu0 0.0
    %150 = vmatpush2.msra.mxu0 0.0
    %151 = vmatprep.subr.mxu0 0.0
    %152 = vmatpush2.msra.mxu0 0.0
    %153 = vmatprep.subr.mxu0 0.0
    %154 = vmatpush2.msra.mxu0 0.0
    %155 = vmatprep.subr.mxu0 0.0
    %156 = vmatpush2.msra.mxu0 0.0
    %157 = vmatprep.subr.mxu0 0.0
    %158 = vmatpush2.msra.mxu0 0.0
    %159 = vmatprep.subr.mxu0 0.0
    %160 = vmatpush2.msra.mxu0 0.0
    %161 = vmatprep.subr.mxu0 0.0
    %162 = vmatpush2.msra.mxu0 0.0
    %163 = vmatprep.subr.mxu0 0.0
    %164 = vmatpush2.msra.mxu0 0.0
    %165 = vmatprep.subr.mxu0 0.0
    %166 = vmatpush2.msra.mxu0 0.0
    %167 = vmatprep.subr.mxu0 0.0
    %168 = vmatpush2.msra.mxu0 0.0
    %169 = vmatprep.subr.mxu0 0.0
    %170 = vmatpush2.msra.mxu0 0.0
    %171 = vmatprep.subr.mxu0 0.0
    %172 = vmatpush2.msra.mxu0 0.0
    %173 = vmatprep.subr.mxu0 0.0
    %174 = vmatpush2.msra.mxu0 0.0
    %175 = vmatprep.subr.mxu0 0.0
    %176 = vmatpush2.msra.mxu0 0.0
    %177 = vmatprep.subr.mxu0 0.0
    %178 = vmatpush2.msra.mxu0 0.0
    %179 = vmatprep.mubr.f32.mxu0 0.0
    %180 = vmatmul.mubr.f32.gmra.mxu0 %v109
    %v181 = vpop.f32.mrf.mxu0
    %v182 = vadd.f32 %v104, %v181
    %v183 = vpop.f32.mrf.mxu0
    %184 = vdwg.mxu0
    %v185 = vld [vmem:[%s4] sm:$0x1]
    %v187 = vlaneseq
    %v188 = vshrl.u32 %v187, 7
    %v189 = vsub.s32 0, %v188
    %v190 = vrot.slane %v185, %v189
    %v192 = vadd.f32 %v182, %v190
    %v193 = vmax.f32 %v192, 0.0
    %vm194 = vcmask 261120
    %195 = vst.msk [vmem:[#allocation2] sm:$0xff] %vm194, %v193
    // Predicated region
    $region22: #{tpu_custom_call.1} parent=1 // pred_check
      _
    $region23: #{tpu_custom_call.1} parent=1 // pred_check_branch
      %197 = sbr.rel (0) target = $region25
    $region24: #{tpu_custom_call.1} parent=1 // pred_region
      %s199 = ssub.s32 128, 128
      %200 = vsyncadd [#allocation3], %s199
      %s202 = sshll.u32 [#allocation2], 4
      %s203 = int_to_ptr.vmem [resolvable:$true] %s202
      %205 = dma.vmem_to_hbm [thread:$0]  %s203, 128, %s5, [#allocation3]
    $region25: #{tpu_custom_call.1} parent=1 // pred_fallthru
      _
    // Predicated region
    $region26: #{tpu_custom_call.1} parent=1 // pred_check
      _
    $region27: #{tpu_custom_call.1} parent=1 // pred_check_branch
      %207 = sbr.rel (0) target = $region29
    $region28: #{tpu_custom_call.1} parent=1 // pred_region
      %208 = dma.done [#allocation3], 128
    $region29: #{tpu_custom_call.1} parent=1 // pred_fallthru
      _
    %209 = vsyncpa [#allocation3], 1

</llo_original>
